<compile_context>
chip_gen: v7x
topology: tpu7x:2x2x1
jax: 0.10.0
libtpu: 0.0.40
codegen_flags: <defaults>
</compile_context>

<pallas_src>
import functools

import jax
import jax.numpy as jnp
from jax import lax
from jax.experimental import pallas as pl
from jax.experimental.pallas import tpu as pltpu


def _round_up(x, m):
    return (x + m - 1) // m * m


def _vmem_budget_bytes():
    """~75% of physical VMEM; conservative 64 MiB fallback (v7x-sized)."""
    cap = 64 << 20
    try:
        info = pltpu.get_tpu_info()
        cap = int(getattr(info, "vmem_capacity_bytes", cap)) or cap
    except Exception:
        pass
    return max(32 << 20, (cap * 3) // 4)


def cam_kernel(gamma_ref, x_ref, o_ref, *scratch, use_bf16_matmul, resident):
    """Grid: (batch, phase, n_tile). x_ref/o_ref: (1, Cp, tn) VMEM tiles."""
    p = pl.program_id(1)
    t = pl.program_id(2)

    energy_ref = scratch[0]                       # (Cp, Cp) f32 accumulator
    si = 1
    if use_bf16_matmul:
        attn_ref = scratch[si]                    # (Cp, Cp) bf16 attention cache
        si += 1
    else:
        attn_ref = energy_ref                     # tanh written back in place
    slab_ref = scratch[si] if resident else None  # (NT, Cp, tn) resident x copy

    @pl.when(jnp.logical_and(p == 0, t == 0))
    def _init_energy():
        energy_ref[...] = jnp.zeros_like(energy_ref)

    @pl.when(p == 0)
    def _accumulate_energy():
        v = x_ref[0]                              # (Cp, tn), input dtype
        if resident:
            slab_ref[t] = v                       # keep in VMEM for phase 1
        vm = v.astype(jnp.bfloat16) if use_bf16_matmul else v
        # energy += x_tile @ x_tile^T  (contract over the spatial tile).
        energy_ref[...] += lax.dot_general(
            vm, vm,
            dimension_numbers=(((1,), (1,)), ((), ())),
            preferred_element_type=jnp.float32,
        )

    @pl.when(jnp.logical_and(p == 1, t == 0))
    def _finalize_attention():
        # attention = tanh(rowmax(energy) - energy), once, cached in MXU dtype.
        energy = energy_ref[...]
        e_max = jnp.max(energy, axis=-1, keepdims=True)
        attn_ref[...] = jnp.tanh(e_max - energy).astype(attn_ref.dtype)

    @pl.when(p == 1)
    def _apply_attention():
        v = slab_ref[t] if resident else x_ref[0]
        attn = attn_ref[...]
        out = jnp.dot(attn, v.astype(attn.dtype),
                      preferred_element_type=jnp.float32)
        gamma = gamma_ref[0]
        # Residual add in f32, single cast to the output dtype at the end.
        o_ref[0] = (gamma * out + v.astype(jnp.float32)).astype(o_ref.dtype)


def _plan_tiles(C, N, in_dsize, out_dsize, use_bf16_matmul,
                max_tn=None, force_streaming=False):
    """Pick (Cp, tn, Np, resident) under the generation's VMEM budget."""
    # Channel padding: sublane multiple; bump to 16 (bf16 pack) / 128
    # (lane-dense energy, clean MXU contraction) only when cheap (<~12-25%).
    Cp = _round_up(C, 8)
    if use_bf16_matmul and _round_up(C, 16) * 4 <= Cp * 5:
        Cp = _round_up(C, 16)
    if _round_up(C, 128) * 8 <= Cp * 9:
        Cp = _round_up(C, 128)

    budget = _vmem_budget_bytes()
    # Fixed VMEM: f32 energy scratch (+ f32 finalize temp allowance)
    # (+ bf16 attention cache), plus general headroom.
    fixed = Cp * Cp * 8 + (Cp * Cp * 2 if use_bf16_matmul else 0)
    headroom = 4 << 20
    avail = budget - fixed - headroom
    # Per spatial column of a tile: 2 input bufs + 2 output bufs + ~2 f32 temps.
    per_col = Cp * (2 * in_dsize + 2 * out_dsize + 8)
    if avail < 128 * per_col:
        # TODO(synk): add a channel-row-blocked energy/attention path so the
        # (Cp, Cp) scratch need not fit VMEM whole for very large C.
        raise ValueError(
            f"CAM kernel: C={C} (padded {Cp}) too large for VMEM budget "
            f"{budget} bytes; channel-row-blocked path not implemented.")

    tn_cap = min(8192, (avail // per_col) // 128 * 128)
    if max_tn is not None:
        tn_cap = min(tn_cap, _round_up(int(max_tn), 128))
    tn_cap = max(128, tn_cap)

    def pick(cap):
        # Minimize padded work (Np) with a mild penalty on tiny tiles so the
        # ~0.35 us/step pipeline overhead stays amortized.
        best = None
        for cand in range(128, cap + 1, 128):
            np_c = _round_up(N, cand)
            key = (np_c + (np_c // cand) * 32, -cand)
            if best is None or key < best[0]:
                best = (key, cand, np_c)
        return best[1], best[2]

    tn, Np = pick(tn_cap)

    resident = False
    if not force_streaming:
        slab = Cp * Np * in_dsize
        if slab + tn * per_col <= avail:
            resident = True
        else:
            # Shrinking the tile to make the slab fit is usually worth it:
            # it removes a full HBM read pass of x.
            cap2 = (avail - slab) // per_col // 128 * 128
            if cap2 >= 256:
                tn2, Np2 = pick(int(cap2))
                if Cp * Np2 * in_dsize + tn2 * per_col <= avail:
                    tn, Np, resident = tn2, Np2, True

    return Cp, tn, Np, resident, int(budget)


def cam_module(x, gamma, *, use_bf16_matmul=True, cast_input_to_bf16=False,
               _max_tn=None, _force_streaming=False):
    """x: (B, C, H, W), gamma: (1,) -> (B, C, H, W). Matches CAM_Module.forward.

    cast_input_to_bf16: opt-in bandwidth halving — x is streamed/held in bf16
    (the residual add then also uses the bf16 copy of x).
    """
    B, C, H, W = x.shape
    N = H * W
    x_flat = x.reshape(B, C, N)
    if cast_input_to_bf16:
        x_flat = x_flat.astype(jnp.bfloat16)
    in_dsize = x_flat.dtype.itemsize
    out_dtype = x.dtype
    out_dsize = jnp.dtype(out_dtype).itemsize

    Cp, tn, Np, resident, vmem_limit = _plan_tiles(
        C, N, in_dsize, out_dsize, use_bf16_matmul, _max_tn, _force_streaming)
    NT = Np // tn

    # Zero padding is exact: zero channels/columns add nothing to energy, the
    # diagonal ||x_c||^2 >= 0 keeps each row max unaffected, and zero rows of
    # x contribute nothing to attention @ x. Padded outputs are sliced off.
    if Cp != C or Np != N:
        x_flat = jnp.pad(x_flat, ((0, 0), (0, Cp - C), (0, Np - N)))

    gamma = jnp.asarray(gamma, jnp.float32).reshape(1)

    scratch = [pltpu.VMEM((Cp, Cp), jnp.float32)]            # energy accumulator
    if use_bf16_matmul:
        scratch.append(pltpu.VMEM((Cp, Cp), jnp.bfloat16))   # attention cache
    if resident:
        scratch.append(pltpu.VMEM((NT, Cp, tn), x_flat.dtype))  # resident x slab

    if resident:
        # Phase 1 pins the x block to the last phase-0 block -> no re-fetch.
        x_index_map = lambda b, p, t: (b, 0, t + p * (NT - 1 - t))
    else:
        x_index_map = lambda b, p, t: (b, 0, t)

    kernel = functools.partial(
        cam_kernel, use_bf16_matmul=use_bf16_matmul, resident=resident)

    flops = 4 * B * Cp * Cp * Np                  # two (Cp,Cp,Np) matmuls
    bytes_accessed = B * Cp * Np * (in_dsize * (1 if resident else 2) + out_dsize)

    out_flat = pl.pallas_call(
        kernel,
        out_shape=jax.ShapeDtypeStruct((B, Cp, Np), out_dtype),
        grid=(B, 2, NT),
        in_specs=[
            pl.BlockSpec(memory_space=pltpu.MemorySpace.SMEM),     # gamma (1,)
            pl.BlockSpec((1, Cp, tn), x_index_map),                # x tiles
        ],
        # Phase 0 holds output block 0 resident (no garbage writeback);
        # phase 1 writes each spatial tile exactly once.
        out_specs=pl.BlockSpec((1, Cp, tn), lambda b, p, t: (b, 0, p * t)),
        scratch_shapes=scratch,
        compiler_params=pltpu.CompilerParams(
            dimension_semantics=("parallel", "arbitrary", "arbitrary"),
            vmem_limit_bytes=vmem_limit,
        ),
        cost_estimate=pl.CostEstimate(
            flops=flops,
            transcendentals=B * Cp * Cp,
            bytes_accessed=bytes_accessed,
        ),
    )(gamma, x_flat)

    return out_flat[:, :C, :N].reshape(B, C, H, W)


def cam_module_ref(x, gamma):
    """Pure-JAX reference mirroring the PyTorch forward."""
    B, C, H, W = x.shape
    v = x.reshape(B, C, H * W)
    energy = jnp.einsum("bcn,bdn->bcd", v, v)
    energy_new = jnp.max(energy, axis=-1, keepdims=True) - energy
    attention = jnp.tanh(energy_new)
    out = jnp.einsum("bcd,bdn->bcn", attention, v).reshape(B, C, H, W)
    return gamma[0] * out + x


if __name__ == "__main__":
    key = jax.random.PRNGKey(0)
    B, C, H, W = 2, 4, 16, 16
    x = jax.random.normal(key, (B, C, H, W), dtype=jnp.float32)

    # Parameter init matches nn.Parameter(torch.zeros(1)).
    gamma0 = jnp.zeros((1,), dtype=jnp.float32)
    out = jax.block_until_ready(cam_module(x, gamma0))
    ref = cam_module_ref(x, gamma0)
    assert out.shape == (B, C, H, W)
    assert jnp.allclose(out, ref, atol=1e-5, rtol=1e-5), "mismatch (gamma=0)"

    # Nonzero gamma exercises the attention path. bf16 MXU operands with f32
    # accumulation -> loosened tolerance vs the f32 reference.
    gamma = jnp.array([0.5], dtype=jnp.float32)
    ref_g = cam_module_ref(x, gamma)
    out_bf16 = jax.block_until_ready(cam_module(x, gamma, use_bf16_matmul=True))
    assert jnp.allclose(out_bf16, ref_g, atol=3e-2, rtol=3e-2), "mismatch (bf16)"

    # f32-operand path for a strict numerical check.
    out_f32 = jax.block_until_ready(cam_module(x, gamma, use_bf16_matmul=False))
    assert jnp.allclose(out_f32, ref_g, atol=1e-4, rtol=1e-4), "mismatch (f32)"

    # Odd channel count + non-multiple-of-128 spatial size: padding paths.
    x2 = jax.random.normal(jax.random.PRNGKey(1), (1, 6, 7, 7), dtype=jnp.float32)
    out2 = jax.block_until_ready(cam_module(x2, gamma, use_bf16_matmul=False))
    assert jnp.allclose(out2, cam_module_ref(x2, gamma),
                        atol=1e-4, rtol=1e-4), "mismatch (padded 7x7)"

    # Multi-tile spatial grid (NT > 1): resident-slab path vs streaming
    # fallback must agree with each other and with the reference.
    x3 = jax.random.normal(jax.random.PRNGKey(2), (1, 16, 32, 32), dtype=jnp.float32)
    ref3 = cam_module_ref(x3, gamma)
    out3r = jax.block_until_ready(
        cam_module(x3, gamma, use_bf16_matmul=False, _max_tn=256))
    out3s = jax.block_until_ready(
        cam_module(x3, gamma, use_bf16_matmul=False, _max_tn=256,
                   _force_streaming=True))
    assert jnp.allclose(out3r, out3s, atol=1e-6, rtol=1e-6), "resident!=streaming"
    assert jnp.allclose(out3r, ref3, atol=3e-2, rtol=3e-2), "mismatch (multi-tile)"

    # Opt-in bandwidth halving: bf16 input slab (residual also bf16).
    out_cast = jax.block_until_ready(
        cam_module(x, gamma, use_bf16_matmul=True, cast_input_to_bf16=True))
    assert jnp.allclose(out_cast, ref_g, atol=3e-2, rtol=3e-2), "mismatch (bf16 in)"

    print("KERNEL_OK")
</pallas_src>

<mosaic_0001>
module attributes {stable_mosaic.version = 11 : i64} {
  func.func @cam_kernel(%arg0: i32, %arg1: i32, %arg2: i32, %arg3: memref<1xf32, #tpu.memory_space<smem>>, %arg4: memref<1x8x256xf32, #tpu.memory_space<vmem>>, %arg5: memref<1x8x256xf32, #tpu.memory_space<vmem>>, %arg6: memref<8x8xf32, #tpu.memory_space<vmem>>, %arg7: memref<8x8xbf16, #tpu.memory_space<vmem>>, %arg8: memref<1x8x256xf32, #tpu.memory_space<vmem>>) attributes {dimension_semantics = [#tpu.dimension_semantics<parallel>, #tpu.dimension_semantics<arbitrary>, #tpu.dimension_semantics<arbitrary>], iteration_bounds = array<i64: 2, 2, 1>, scalar_prefetch = 0 : i64, scratch_operands = 3 : i64, tpu.core_type = #tpu.core_type<tc>, window_params = [{transform_indices = @transform_0, window_bounds = array<i64: 1>}, {transform_indices = @transform_1, window_bounds = array<i64: 1, 8, 256>}, {transform_indices = @transform_2, window_bounds = array<i64: 1, 8, 256>}]} {
    %c0_i32 = arith.constant 0 : i32
    %0 = arith.cmpi eq, %arg1, %c0_i32 : i32
    %c0_i32_0 = arith.constant 0 : i32
    %1 = arith.cmpi eq, %arg2, %c0_i32_0 : i32
    %2 = arith.andi %0, %1 : i1
    %3 = arith.extui %2 : i1 to i32
    %c0_i32_1 = arith.constant 0 : i32
    %4 = arith.cmpi ne, %3, %c0_i32_1 : i32
    scf.if %4 {
      %cst = arith.constant 0.000000e+00 : f32
      %16 = vector.broadcast %cst : f32 to vector<8x8xf32>
      %c0 = arith.constant 0 : index
      %c0_8 = arith.constant 0 : index
      %17 = vector.load %arg6[%c0, %c0_8] : memref<8x8xf32, #tpu.memory_space<vmem>>, vector<8x8xf32>
      tpu.vector_store %arg6[%c0, %c0_8], %16 {strides = array<i32>} : memref<8x8xf32, #tpu.memory_space<vmem>>, vector<8x8xf32>,
    } else {
    }
    %c0_i32_2 = arith.constant 0 : i32
    %5 = arith.cmpi eq, %arg1, %c0_i32_2 : i32
    %6 = arith.extui %5 : i1 to i32
    %c0_i32_3 = arith.constant 0 : i32
    %7 = arith.cmpi ne, %6, %c0_i32_3 : i32
    scf.if %7 {
      %c0 = arith.constant 0 : index
      %c0_8 = arith.constant 0 : index
      %c0_9 = arith.constant 0 : index
      %16 = vector.load %arg4[%c0, %c0_8, %c0_9] : memref<1x8x256xf32, #tpu.memory_space<vmem>>, vector<1x8x256xf32>
      %17 = vector.shape_cast %16 : vector<1x8x256xf32> to vector<8x256xf32>
      %18 = arith.index_cast %arg2 : i32 to index
      %c0_10 = arith.constant 0 : index
      %c0_11 = arith.constant 0 : index
      %19 = vector.load %arg8[%18, %c0_10, %c0_11] : memref<1x8x256xf32, #tpu.memory_space<vmem>>, vector<1x8x256xf32>
      %20 = vector.shape_cast %19 : vector<1x8x256xf32> to vector<8x256xf32>
      %21 = vector.shape_cast %17 : vector<8x256xf32> to vector<1x8x256xf32>
      tpu.vector_store %arg8[%18, %c0_10, %c0_11], %21 {strides = array<i32>} : memref<1x8x256xf32, #tpu.memory_space<vmem>>, vector<1x8x256xf32>,
      %22 = arith.truncf %17 : vector<8x256xf32> to vector<8x256xbf16>
      %c0_12 = arith.constant 0 : index
      %c0_13 = arith.constant 0 : index
      %23 = vector.load %arg6[%c0_12, %c0_13] : memref<8x8xf32, #tpu.memory_space<vmem>>, vector<8x8xf32>
      %cst = arith.constant dense<0.000000e+00> : vector<8x8xf32>
      %24 = tpu.matmul %22, %22, %cst {dimension_numbers = #tpu.dot_dimension_numbers<[1], [1], [0], [0], [0, 0, 1, 0], [], []>} : vector<8x256xbf16>, vector<8x256xbf16>, vector<8x8xf32> -> vector<8x8xf32>
      %25 = arith.addf %23, %24 : vector<8x8xf32>
      %c0_14 = arith.constant 0 : index
      %c0_15 = arith.constant 0 : index
      %26 = vector.load %arg6[%c0_14, %c0_15] : memref<8x8xf32, #tpu.memory_space<vmem>>, vector<8x8xf32>
      tpu.vector_store %arg6[%c0_14, %c0_15], %25 {strides = array<i32>} : memref<8x8xf32, #tpu.memory_space<vmem>>, vector<8x8xf32>,
    } else {
    }
    %c1_i32 = arith.constant 1 : i32
    %8 = arith.cmpi eq, %arg1, %c1_i32 : i32
    %c0_i32_4 = arith.constant 0 : i32
    %9 = arith.cmpi eq, %arg2, %c0_i32_4 : i32
    %10 = arith.andi %8, %9 : i1
    %11 = arith.extui %10 : i1 to i32
    %c0_i32_5 = arith.constant 0 : i32
    %12 = arith.cmpi ne, %11, %c0_i32_5 : i32
    scf.if %12 {
      %c0 = arith.constant 0 : index
      %c0_8 = arith.constant 0 : index
      %16 = vector.load %arg6[%c0, %c0_8] : memref<8x8xf32, #tpu.memory_space<vmem>>, vector<8x8xf32>
      %cst = arith.constant dense<0xFF800000> : vector<8xf32>
      %17 = vector.multi_reduction <maximumf>, %16, %cst [1] : vector<8x8xf32> to vector<8xf32>
      %18 = vector.shape_cast %17 : vector<8xf32> to vector<8x1xf32>
      %19 = vector.broadcast %18 : vector<8x1xf32> to vector<8x8xf32>
      %20 = arith.subf %19, %16 : vector<8x8xf32>
      %21 = math.tanh %20 : vector<8x8xf32>
      %22 = arith.truncf %21 : vector<8x8xf32> to vector<8x8xbf16>
      %c0_9 = arith.constant 0 : index
      %c0_10 = arith.constant 0 : index
      %23 = vector.load %arg7[%c0_9, %c0_10] : memref<8x8xbf16, #tpu.memory_space<vmem>>, vector<8x8xbf16>
      tpu.vector_store %arg7[%c0_9, %c0_10], %22 {strides = array<i32>} : memref<8x8xbf16, #tpu.memory_space<vmem>>, vector<8x8xbf16>,
    } else {
    }
    %c1_i32_6 = arith.constant 1 : i32
    %13 = arith.cmpi eq, %arg1, %c1_i32_6 : i32
    %14 = arith.extui %13 : i1 to i32
    %c0_i32_7 = arith.constant 0 : i32
    %15 = arith.cmpi ne, %14, %c0_i32_7 : i32
    scf.if %15 {
      %16 = arith.index_cast %arg2 : i32 to index
      %c0 = arith.constant 0 : index
      %c0_8 = arith.constant 0 : index
      %17 = vector.load %arg8[%16, %c0, %c0_8] : memref<1x8x256xf32, #tpu.memory_space<vmem>>, vector<1x8x256xf32>
      %18 = vector.shape_cast %17 : vector<1x8x256xf32> to vector<8x256xf32>
      %c0_9 = arith.constant 0 : index
      %c0_10 = arith.constant 0 : index
      %19 = vector.load %arg7[%c0_9, %c0_10] : memref<8x8xbf16, #tpu.memory_space<vmem>>, vector<8x8xbf16>
      %20 = arith.truncf %18 : vector<8x256xf32> to vector<8x256xbf16>
      %cst = arith.constant dense<0.000000e+00> : vector<8x256xf32>
      %21 = tpu.matmul %19, %20, %cst {dimension_numbers = #tpu.dot_dimension_numbers<[1], [0], [0], [1], [0, 0, 1, 1], [], []>} : vector<8x8xbf16>, vector<8x256xbf16>, vector<8x256xf32> -> vector<8x256xf32>
      %c0_11 = arith.constant 0 : index
      %22 = memref.load %arg3[%c0_11] : memref<1xf32, #tpu.memory_space<smem>>
      %23 = vector.broadcast %22 : f32 to vector<8x256xf32>
      %24 = arith.mulf %23, %21 : vector<8x256xf32>
      %25 = arith.addf %24, %18 : vector<8x256xf32>
      %c0_12 = arith.constant 0 : index
      %c0_13 = arith.constant 0 : index
      %c0_14 = arith.constant 0 : index
      %26 = vector.load %arg5[%c0_12, %c0_13, %c0_14] : memref<1x8x256xf32, #tpu.memory_space<vmem>>, vector<1x8x256xf32>
      %27 = vector.shape_cast %26 : vector<1x8x256xf32> to vector<8x256xf32>
      %28 = vector.shape_cast %25 : vector<8x256xf32> to vector<1x8x256xf32>
      tpu.vector_store %arg5[%c0_12, %c0_13, %c0_14], %28 {strides = array<i32>} : memref<1x8x256xf32, #tpu.memory_space<vmem>>, vector<1x8x256xf32>,
    } else {
    }
    return
  }
  func.func @transform_0(%arg0: i32, %arg1: i32, %arg2: i32) -> i32 {
    %c0_i32 = arith.constant 0 : i32
    %c0_i32_0 = arith.constant 0 : i32
    return %c0_i32 : i32
  }
  func.func @transform_1(%arg0: i32, %arg1: i32, %arg2: i32) -> (i32, i32, i32) {
    %c0_i32 = arith.constant 0 : i32
    %0 = arith.subi %c0_i32, %arg2 : i32
    %1 = arith.muli %arg1, %0 : i32
    %2 = arith.addi %arg2, %1 : i32
    %c0_i32_0 = arith.constant 0 : i32
    %c0_i32_1 = arith.constant 0 : i32
    return %arg0, %c0_i32_0, %2 : i32, i32, i32
  }
  func.func @transform_2(%arg0: i32, %arg1: i32, %arg2: i32) -> (i32, i32, i32) {
    %0 = arith.muli %arg1, %arg2 : i32
    %c0_i32 = arith.constant 0 : i32
    %c0_i32_0 = arith.constant 0 : i32
    return %arg0, %c0_i32, %0 : i32, i32, i32
  }
}

</mosaic_0001>

<llo_original>
// kernel: tpu_custom_call.1
$region0: #{tpu_custom_call.1}
  #allocation0 [shape = 'u32[]', space=smem, size = 0x4, offset = 0x4, fixed_abs, tag = 'smem constant byte address 0x4 - core index']
  #allocation1 [shape = 'u32[144,128]{1,0:T(1,128)}', space=vmem, size = 0x12000, scoped, tag = 'internal scratch']
  #allocation2 [shape = 'f32[8,8]{1,0:T(8,128)}', space=vmem, size = 0x1000, scoped, tag = 'scratch operand']
  #allocation3 [shape = 'bf16[8,8]{1,0:T(8,128)(2,1)}', space=vmem, size = 0x800, scoped, tag = 'scratch operand']
  #allocation4 [shape = 'f32[1,8,256]{2,1,0:T(8,128)}', space=vmem, size = 0x2000, scoped, tag = 'scratch operand']
  #allocation5 [shape = 'f32[1]{0:T(128)S(6)}', space=smem, size = 0x200, scoped, tag = 'scoped memory for tpu_custom_call.1']
  %s0 = inlined_call_operand.<no memory space> [shape: f32[1], index: 0, kind: input, shape index: {}]
  %s1 = inlined_call_operand.hbm [shape: f32[2,8,256], index: 1, kind: input, shape index: {}]
  %s2 = inlined_call_operand.hbm [shape: f32[2,8,256], index: 2, kind: output, shape index: {}]
  %s3 = sld [smem:[#allocation0]]
  $region61: #{tpu_custom_call.1} parent=0
    _
  %s5 = ssub.s32 1, %s3
  %s6 = scalar_select 0, %s5, %s3
  %7 = sst [smem:[#allocation5]] %s0
  $region1: #{tpu_custom_call.1} parent=0
    #allocation6 [shape = 'u8[16384]{0}', space=vmem, size = 0x4000, scoped, tag = 'input window, operand 1']
    #allocation7 [shape = 's32[2]{0}', space=sflag, size = 0x8, scoped, tag = 'scoped memory for tpu_custom_call.1']
    #allocation8 [shape = 's32[2]{0}', space=sflag, size = 0x8, scoped, tag = 'scoped memory for tpu_custom_call.1']
    #allocation9 [shape = 'u8[16384]{0}', space=vmem, size = 0x4000, scoped, tag = 'output window, operand 0']
    %8 = vsyncpa [#allocation7], 0
    %s9 = scalar_lea.sflag [#allocation7], 1
    %10 = vsyncpa %s9, 0
    %11 = vsyncpa [#allocation8], 0
    %s12 = scalar_lea.sflag [#allocation8], 1
    %13 = vsyncpa %s12, 0
    loop: start=0, step=1, limit=6
    $region2: #{tpu_custom_call.1} parent=1 // loop_pre_header
      _
    $region3: #{tpu_custom_call.1} parent=1 // loop_header
      %s15 = sphi 0, %s19
      %p16 = scmp.ge.s32.totalorder %s15, 6
      %s22 = sphi 0, %s41
      %s23 = sphi 0, %s37
      %s24 = sphi 0, %s33
      %s25 = sphi 0, %s22
      %s26 = sphi 0, %s23
      %s27 = sphi 0, %s24
      %s28 = sphi 0, %s25
      %s29 = sphi 0, %s26
      %s30 = sphi 0, %s27
      %s42 = sphi 0, %s42
      %s44 = sphi 0, %s42
      %s45 = sphi 0, %s44
      %s59 = sphi 0, %s45
      %s73 = sphi 0, %s75
      %s76 = sphi 0, %s73
      %s77 = sphi 0, %s76
      %s93 = sphi 0, %s77
      %s103 = sphi 0, %s105
      %s106 = sphi 0, %s103
      %s107 = sphi 0, %s106
      %s123 = sphi 0, %s107
    $region4: #{tpu_custom_call.1} parent=1 // loop_header_branch
      %18 = sbr.rel (%p16) target = $region8
    $region5: #{tpu_custom_call.1} parent=1 // loop_body
      %s20 = ssub.s32 %s15, 1
      %s21 = ssub.s32 %s15, 2
      %s31 = sadd.s32 1, %s24
      %p32 = scmp.ge.s32.totalorder %s31, 1
      %s33 = scalar_select %p32, 0, %s31
      %s34 = sadd.s32 1, %s23
      %s35 = scalar_select %p32, %s34, %s23
      %p36 = scmp.ge.s32.totalorder %s35, 2
      %s37 = scalar_select %p36, 0, %s35
      %s38 = sadd.s32 1, %s22
      %s39 = scalar_select %p36, %s38, %s22
      %p40 = scmp.ge.s32.totalorder %s39, 2
      %s41 = scalar_select %p40, 0, %s39
      %s43 = sadd.s32 %s42, 1
      %p46 = scmp.eq.s32.totalorder %s15, 3
      %p47 = scmp.ne.s32.totalorder %s42, %s44
      %p48 = scmp.eq.s32.totalorder %s15, 0
      %p49 = por %p47, %p48
      %p50 = scmp.ne.s32.totalorder %s42, %s44
      %p51 = scmp.eq.s32.totalorder %s20, 3
      %p52 = por %p50, %p51
      %p53 = scmp.ne.s32.totalorder %s44, %s45
      %p54 = scmp.eq.s32.totalorder %s20, 0
      %p55 = por %p53, %p54
      %p56 = scmp.ne.s32.totalorder %s44, %s45
      %p57 = scmp.eq.s32.totalorder %s21, 3
      %p58 = por %p56, %p57
      %p60 = scmp.ne.s32.totalorder %s45, %s59
      %p61 = scmp.eq.s32.totalorder %s21, 0
      %p62 = por %p60, %p61
      %s63 = ssub.s32 0, %s24
      %s64 = smul.u32 %s23, %s63
      %s65 = sadd.s32 %s24, %s64
      %s66 = ssub.s32 0, %s33
      %s67 = smul.u32 %s37, %s66
      %s68 = sadd.s32 %s33, %s67
      %s69 = ssub.s32 %s22, %s41
      %s70 = ssub.s32 %s65, %s68
      %s71 = sor.u32 %s69, %s70
      %p72 = scmp.eq.s32.totalorder %s71, 0
      %s74 = sadd.s32 %s73, 1
      %s75 = scalar_select %p72, %s73, %s74
      %p78 = pneg %p72
      %p79 = scmp.eq.s32.totalorder %s15, 3
      %p80 = por %p78, %p79
      %p81 = scmp.ne.s32.totalorder %s73, %s76
      %p82 = scmp.eq.s32.totalorder %s15, 0
      %p83 = por %p81, %p82
      %p84 = scmp.ne.s32.totalorder %s73, %s76
      %p85 = scmp.eq.s32.totalorder %s20, 3
      %p86 = por %p84, %p85
      %p87 = scmp.ne.s32.totalorder %s76, %s77
      %p88 = scmp.eq.s32.totalorder %s20, 0
      %p89 = por %p87, %p88
      %p90 = scmp.ne.s32.totalorder %s76, %s77
      %p91 = scmp.eq.s32.totalorder %s21, 3
      %p92 = por %p90, %p91
      %p94 = scmp.ne.s32.totalorder %s77, %s93
      %p95 = scmp.eq.s32.totalorder %s21, 0
      %p96 = por %p94, %p95
      %s97 = smul.u32 %s23, %s24
      %s98 = smul.u32 %s37, %s33
      %s99 = ssub.s32 %s22, %s41
      %s100 = ssub.s32 %s97, %s98
      %s101 = sor.u32 %s99, %s100
      %p102 = scmp.eq.s32.totalorder %s101, 0
      %s104 = sadd.s32 %s103, 1
      %s105 = scalar_select %p102, %s103, %s104
      %p108 = pneg %p102
      %p109 = scmp.eq.s32.totalorder %s15, 3
      %p110 = por %p108, %p109
      %p111 = scmp.ne.s32.totalorder %s103, %s106
      %p112 = scmp.eq.s32.totalorder %s15, 0
      %p113 = por %p111, %p112
      %p114 = scmp.ne.s32.totalorder %s103, %s106
      %p115 = scmp.eq.s32.totalorder %s20, 3
      %p116 = por %p114, %p115
      %p117 = scmp.ne.s32.totalorder %s106, %s107
      %p118 = scmp.eq.s32.totalorder %s20, 0
      %p119 = por %p117, %p118
      %p120 = scmp.ne.s32.totalorder %s106, %s107
      %p121 = scmp.eq.s32.totalorder %s21, 3
      %p122 = por %p120, %p121
      %p124 = scmp.ne.s32.totalorder %s107, %s123
      %p125 = scmp.eq.s32.totalorder %s21, 0
      %p126 = por %p124, %p125
      %p127 = scmp.le.s32.totalorder 1, %s15
      %p128 = scmp.lt.s32.totalorder %s15, 5
      %p129 = pnand %p127, %p128
      %p130 = pneg %p129
      // Predicated region
      $region9: #{tpu_custom_call.1} parent=5 // pred_check
        _
      $region10: #{tpu_custom_call.1} parent=5 // pred_check_branch
        %132 = sbr.rel (%p129) target = $region12
      $region11: #{tpu_custom_call.1} parent=5 // pred_region
        %s133 = ssub.s32 %s15, 1
        // Predicated region
        $region13: #{tpu_custom_call.1} parent=11 // pred_check
          %p134 = pneg %p55
        $region14: #{tpu_custom_call.1} parent=11 // pred_check_branch
          %136 = sbr.rel (%p134) target = $region16
        $region15: #{tpu_custom_call.1} parent=11 // pred_region
          _
        $region16: #{tpu_custom_call.1} parent=11 // pred_fallthru
          _
      $region12: #{tpu_custom_call.1} parent=5 // pred_fallthru
        _
      %p137 = scmp.lt.s32.totalorder %s15, 4
      // Predicated region
      $region17: #{tpu_custom_call.1} parent=5 // pred_check
        %p138 = pneg %p137
      $region18: #{tpu_custom_call.1} parent=5 // pred_check_branch
        %140 = sbr.rel (%p138) target = $region20
      $region19: #{tpu_custom_call.1} parent=5 // pred_region
        // Predicated region
        $region21: #{tpu_custom_call.1} parent=19 // pred_check
          %p141 = pneg %p83
        $region22: #{tpu_custom_call.1} parent=19 // pred_check_branch
          %143 = sbr.rel (%p141) target = $region24
        $region23: #{tpu_custom_call.1} parent=19 // pred_region
          %s144 = sand.u32 %s73, 1
          %s145 = scalar_lea.sflag [#allocation7], %s144
          %s146 = sand.u32 %s73, 1
          %s147 = smul.addr %s146, 16
          %s148 = scalar_lea.vmem [#allocation6], %s147
          %s149 = ssub.s32 0, %s24
          %s150 = smul.u32 %s23, %s149
          %s151 = sadd.s32 %s24, %s150
          %s152 = smul.u32 2, %s151
          %s154 = ssub.s32 256, 256
          %155 = vsyncadd %s145, %s154
          %s156 = smul.addr %s22, 2
          %s157 = sadd.s32 %s152, %s156
          %s158 = smul.addr %s157, 128
          %s159 = scalar_lea.hbm %s1, %s158
          %s161 = sshll.u32 %s148, 4
          %s162 = int_to_ptr.vmem [resolvable:$true] %s161
          %164 = dma.hbm_to_vmem [thread:$0]  %s159, 256, %s162, %s145
        $region24: #{tpu_custom_call.1} parent=19 // pred_fallthru
          _
      $region20: #{tpu_custom_call.1} parent=5 // pred_fallthru
        _
      %p165 = scmp.le.s32.totalorder 1, %s15
      %p166 = scmp.lt.s32.totalorder %s15, 5
      %p167 = pnand %p165, %p166
      %p168 = pneg %p167
      // Predicated region
      $region25: #{tpu_custom_call.1} parent=5 // pred_check
        _
      $region26: #{tpu_custom_call.1} parent=5 // pred_check_branch
        %170 = sbr.rel (%p167) target = $region28
      $region27: #{tpu_custom_call.1} parent=5 // pred_region
        %s171 = ssub.s32 %s15, 1
        %s172 = sand.u32 %s76, 1
        %s173 = scalar_lea.sflag [#allocation7], %s172
        %s174 = sand.u32 %s76, 1
        %s175 = smul.addr %s174, 16
        %s176 = scalar_lea.vmem [#allocation6], %s175
        // Predicated region
        $region29: #{tpu_custom_call.1} parent=27 // pred_check
          %p177 = pneg %p89
        $region30: #{tpu_custom_call.1} parent=27 // pred_check_branch
          %179 = sbr.rel (%p177) target = $region32
        $region31: #{tpu_custom_call.1} parent=27 // pred_region
          %180 = dma.done %s173, 256
        $region32: #{tpu_custom_call.1} parent=27 // pred_fallthru
          _
        %p181 = pneg %p55
        %p182 = pneg %p52
        %s183 = sand.u32 %s76, 1
        %s184 = scalar_lea.sflag [#allocation7], %s183
        %s185 = sand.u32 %s76, 1
        %s186 = smul.addr %s185, 16
        %s187 = scalar_lea.vmem [#allocation6], %s186
        %p188 = pneg %p89
        %p189 = pneg %p86
        %p190 = pneg %p119
        %p191 = pneg %p116
        %s192 = sand.u32 %s106, 1
        %s193 = scalar_lea.sflag [#allocation8], %s192
        %s194 = sand.u32 %s106, 1
        %s195 = smul.addr %s194, 16
        %s196 = scalar_lea.vmem [#allocation9], %s195
        %s197 = ssub.s32 0, %s27
        %s198 = smul.u32 %s26, %s197
        %s199 = sadd.s32 %s27, %s198
        %s200 = smul.u32 2, %s199
        %s201 = smul.u32 %s26, %s27
        %s202 = smul.u32 2, %s201
        %p204 = scmp.eq.s32.totalorder %s26, 0
        %p205 = scmp.eq.s32.totalorder %s27, 0
        %p206 = pnand %p204, %p205
        %p207 = pneg %p206
        // Predicated region
        $region33: #{tpu_custom_call.1} parent=27 // pred_check
          _
        $region34: #{tpu_custom_call.1} parent=27 // pred_check_branch
          %209 = sbr.rel (%p206) target = $region36
        $region35: #{tpu_custom_call.1} parent=27 // pred_region
          %vm210 = vcmask 64512
          %211 = vst.msk [vmem:[#allocation2] sm:$0xff] %vm210, 0.0
        $region36: #{tpu_custom_call.1} parent=27 // pred_fallthru
          _
        // Predicated region
        $region37: #{tpu_custom_call.1} parent=27 // pred_check
          %p212 = pneg %p204
        $region38: #{tpu_custom_call.1} parent=27 // pred_check_branch
          %214 = sbr.rel (%p212) target = $region40
        $region39: #{tpu_custom_call.1} parent=27 // pred_region
          %v215 = vld [vmem:[%s176] sm:$0xff]
          %v216 = vld [vmem:[%s176 + $0x8] sm:$0xff]
          %s217 = smul.u32 %s27, 2
          %s218 = smul.addr %s217, 8
          %s219 = scalar_lea.vmem [#allocation4], %s218
          %220 = vst [vmem:[%s219] sm:$0xff] %v215
          %221 = vst [vmem:[%s219 + $0x8] sm:$0xff] %v216
          %v222 = vpack.c.bf16 %v215, %v215
          %v223 = vpack.c.bf16 %v216, %v216
          %v224 = vld [vmem:[#allocation2] sm:$0xff]
          %225 = vmatprep.subr.bf16.mxu0 %v223
          %226 = vmatpush1.bf16.xpose.msra.mxu0 %v222
          %227 = vmatprep.subr.bf16.mxu0 0
          %228 = vmatpush1.bf16.xpose.msra.mxu0 0
          %229 = vmatprep.subr.bf16.mxu0 0
          %230 = vmatpush1.bf16.xpose.msra.mxu0 0
          %231 = vmatprep.subr.bf16.mxu0 0
          %232 = vmatpush1.bf16.xpose.msra.mxu0 0
          %233 = vmatprep.subr.bf16.mxu0 0
          %234 = vmatpush1.bf16.xpose.msra.mxu0 0
          %235 = vmatprep.subr.bf16.mxu0 0
          %236 = vmatpush1.bf16.xpose.msra.mxu0 0
          %237 = vmatprep.subr.bf16.mxu0 0
          %238 = vmatpush1.bf16.xpose.msra.mxu0 0
          %239 = vmatprep.subr.bf16.mxu0 0
          %240 = vmatpush1.bf16.xpose.msra.mxu0 0
          %241 = vmatprep.subr.bf16.mxu0 0
          %242 = vmatpush1.bf16.xpose.msra.mxu0 0
          %243 = vmatprep.subr.bf16.mxu0 0
          %244 = vmatpush1.bf16.xpose.msra.mxu0 0
          %245 = vmatprep.subr.bf16.mxu0 0
          %246 = vmatpush1.bf16.xpose.msra.mxu0 0
          %247 = vmatprep.subr.bf16.mxu0 0
          %248 = vmatpush1.bf16.xpose.msra.mxu0 0
          %249 = vmatprep.subr.bf16.mxu0 0
          %250 = vmatpush1.bf16.xpose.msra.mxu0 0
          %251 = vmatprep.subr.bf16.mxu0 0
          %252 = vmatpush1.bf16.xpose.msra.mxu0 0
          %253 = vmatprep.subr.bf16.mxu0 0
          %254 = vmatpush1.bf16.xpose.msra.mxu0 0
          %255 = vmatprep.subr.bf16.mxu0 0
          %256 = vmatpush1.bf16.xpose.msra.mxu0 0
          %257 = vmatprep.mubr.bf16.mxu0 %v223
          %258 = vmatmul.mubr.bf16.gmra.mrb[0].mxu0 %v222
          %v259 = vpop.f32.mrb[0].mxu0
          %v260 = vadd.f32 0.0, %v259
          %v261 = vpop.f32.mrb[0].mxu0
          %v262 = vpop.f32.mrb[0].mxu0
          %v263 = vpop.f32.mrb[0].mxu0
          %264 = vdwg.mxu0
          %v265 = vadd.f32 %v224, %v260
          %vm266 = vcmask 64512
          %267 = vst.msk [vmem:[#allocation2] sm:$0xff] %vm266, %v265
        $region40: #{tpu_custom_call.1} parent=27 // pred_fallthru
          _
        %p268 = scmp.eq.s32.totalorder %s26, 1
        %p269 = pnand %p268, %p205
        %p270 = pneg %p269
        // Predicated region
        $region41: #{tpu_custom_call.1} parent=27 // pred_check
          _
        $region42: #{tpu_custom_call.1} parent=27 // pred_check_branch
          %272 = sbr.rel (%p269) target = $region44
        $region43: #{tpu_custom_call.1} parent=27 // pred_region
          %v273 = vld [vmem:[#allocation2] sm:$0xff]
          %vm274 = vcmask 64512
          %v275 = vsel %vm274, %v273, -inf
          %276 = vmax.xlane.f32.xlu0 %v275
          %v277 = vpop.xlane.xlu0 %276
          %v278 = vsub.f32 %v277, %v273
          %v279 = vtanh.pop %v278
          %v280 = vpack.c.bf16 %v279, %v279
          %vm281 = vcmask 60416
          %282 = vst.msk [vmem:[#allocation3] sm:$0xf] %vm281, %v280
        $region44: #{tpu_custom_call.1} parent=27 // pred_fallthru
          _
        // Predicated region
        $region45: #{tpu_custom_call.1} parent=27 // pred_check
          %p283 = pneg %p268
        $region46: #{tpu_custom_call.1} parent=27 // pred_check_branch
          %285 = sbr.rel (%p283) target = $region48
        $region47: #{tpu_custom_call.1} parent=27 // pred_region
          %s286 = smul.u32 %s27, 2
          %s287 = smul.addr %s286, 8
          %s288 = scalar_lea.vmem [#allocation4], %s287
          %v289 = vld [vmem:[%s288] sm:$0xff]
          %v290 = vld [vmem:[%s288 + $0x8] sm:$0xff]
          %v291 = vld [vmem:[#allocation3] sm:$0xf]
          %v292 = vpack.c.bf16 %v289, %v289
          %v293 = vpack.c.bf16 %v290, %v290
          %vm294 = vcmask 64512
          %v296 = vsel %vm294, %v291, 0
          %vm298 = vcmask 1043456
          %v300 = vsel %vm298, %v292, 0
          %v303 = vsel %vm298, %v293, 0
          %305 = vmatprep.subr.bf16.mxu0 %v303
          %306 = vmatpush1.bf16.msra.mxu0 %v300
          %307 = vmatprep.subr.bf16.mxu0 0
          %308 = vmatpush1.bf16.msra.mxu0 0
          %309 = vmatprep.subr.bf16.mxu0 0
          %310 = vmatpush1.bf16.msra.mxu0 0
          %311 = vmatprep.subr.bf16.mxu0 0
          %312 = vmatpush1.bf16.msra.mxu0 0
          %313 = vmatprep.subr.bf16.mxu0 0
          %314 = vmatpush1.bf16.msra.mxu0 0
          %315 = vmatprep.subr.bf16.mxu0 0
          %316 = vmatpush1.bf16.msra.mxu0 0
          %317 = vmatprep.subr.bf16.mxu0 0
          %318 = vmatpush1.bf16.msra.mxu0 0
          %319 = vmatprep.subr.bf16.mxu0 0
          %320 = vmatpush1.bf16.msra.mxu0 0
          %321 = vmatprep.subr.bf16.mxu0 0
          %322 = vmatpush1.bf16.msra.mxu0 0
          %323 = vmatprep.subr.bf16.mxu0 0
          %324 = vmatpush1.bf16.msra.mxu0 0
          %325 = vmatprep.subr.bf16.mxu0 0
          %326 = vmatpush1.bf16.msra.mxu0 0
          %327 = vmatprep.subr.bf16.mxu0 0
          %328 = vmatpush1.bf16.msra.mxu0 0
          %329 = vmatprep.subr.bf16.mxu0 0
          %330 = vmatpush1.bf16.msra.mxu0 0
          %331 = vmatprep.subr.bf16.mxu0 0
          %332 = vmatpush1.bf16.msra.mxu0 0
          %333 = vmatprep.subr.bf16.mxu0 0
          %334 = vmatpush1.bf16.msra.mxu0 0
          %335 = vmatprep.subr.bf16.mxu0 0
          %336 = vmatpush1.bf16.msra.mxu0 0
          %337 = vmatprep.mubr.bf16.mxu0 0
          %338 = vmatmul.mubr.bf16.gmra.mrb[0].mxu0 %v296
          %v339 = vpop.f32.mrb[0].mxu0
          %v340 = vadd.f32 0.0, %v339
          %v341 = vpop.f32.mrb[0].mxu0
          %v342 = vadd.f32 0.0, %v341
          %v343 = vpop.f32.mrb[0].mxu0
          %v344 = vpop.f32.mrb[0].mxu0
          %345 = vdwg.mxu0
          %s346 = sld [smem:[#allocation5]]
          %v347 = vstv %s346
          %v348 = vmul.f32 %v347, %v340
          %v349 = vmul.f32 %v347, %v342
          %v350 = vadd.f32 %v348, %v289
          %v351 = vadd.f32 %v349, %v290
          %352 = vst [vmem:[%s196] sm:$0xff] %v350
          %353 = vst [vmem:[%s196 + $0x8] sm:$0xff] %v351
        $region48: #{tpu_custom_call.1} parent=27 // pred_fallthru
          _
        %s354 = sand.u32 %s106, 1
        %s355 = scalar_lea.sflag [#allocation8], %s354
        %s356 = sand.u32 %s106, 1
        %s357 = smul.addr %s356, 16
        %s358 = scalar_lea.vmem [#allocation9], %s357
        // Predicated region
        $region49: #{tpu_custom_call.1} parent=27 // pred_check
          %p359 = pneg %p116
        $region50: #{tpu_custom_call.1} parent=27 // pred_check_branch
          %361 = sbr.rel (%p359) target = $region52
        $region51: #{tpu_custom_call.1} parent=27 // pred_region
          %s362 = smul.u32 %s26, %s27
          %s363 = smul.u32 2, %s362
          %s365 = ssub.s32 256, 256
          %366 = vsyncadd %s355, %s365
          %s367 = smul.addr %s25, 2
          %s368 = sadd.s32 %s363, %s367
          %s369 = smul.addr %s368, 128
          %s370 = scalar_lea.hbm %s2, %s369
          %s372 = sshll.u32 %s358, 4
          %s373 = int_to_ptr.vmem [resolvable:$true] %s372
          %375 = dma.vmem_to_hbm [thread:$0]  %s373, 256, %s370, %s355
        $region52: #{tpu_custom_call.1} parent=27 // pred_fallthru
          _
      $region28: #{tpu_custom_call.1} parent=5 // pred_fallthru
        _
      %p376 = scmp.le.s32.totalorder 2, %s15
      // Predicated region
      $region53: #{tpu_custom_call.1} parent=5 // pred_check
        %p377 = pneg %p376
      $region54: #{tpu_custom_call.1} parent=5 // pred_check_branch
        %379 = sbr.rel (%p377) target = $region56
      $region55: #{tpu_custom_call.1} parent=5 // pred_region
        %s380 = ssub.s32 %s15, 2
        // Predicated region
        $region57: #{tpu_custom_call.1} parent=55 // pred_check
          %p381 = pneg %p122
        $region58: #{tpu_custom_call.1} parent=55 // pred_check_branch
          %383 = sbr.rel (%p381) target = $region60
        $region59: #{tpu_custom_call.1} parent=55 // pred_region
          %s384 = sand.u32 %s107, 1
          %s385 = scalar_lea.sflag [#allocation8], %s384
          %s386 = sand.u32 %s107, 1
          %s387 = smul.addr %s386, 16
          %s388 = scalar_lea.vmem [#allocation9], %s387
          %389 = dma.done %s385, 256
        $region60: #{tpu_custom_call.1} parent=55 // pred_fallthru
          _
      $region56: #{tpu_custom_call.1} parent=5 // pred_fallthru
        _
    $region6: #{tpu_custom_call.1} parent=1 // loop_footer
      %s19 = sadd.s32 1, %s15
    $region7: #{tpu_custom_call.1} parent=1 // loop_footer_branch
      %14 = sbr.rel target = $region3
    $region8: #{tpu_custom_call.1} parent=1 // loop_exit
      _
    %390 = vsyncpa [#allocation7], 1
    %s391 = scalar_lea.sflag [#allocation7], 1
    %392 = vsyncpa %s391, 1
    %393 = vsyncpa [#allocation8], 1
    %s394 = scalar_lea.sflag [#allocation8], 1
    %395 = vsyncpa %s394, 1

</llo_original>
